<compile_context>
chip_gen: v5e
topology: v5e:2x2
jax: 0.10.0
libtpu: 0.0.40
codegen_flags: <defaults>
</compile_context>

<pallas_src>
import jax
import jax.numpy as jnp
from jax.experimental import pallas as pl
from jax.experimental.pallas import tpu as pltpu

_LEAKY_SLOPE = 0.2
_BN_EPS = 1e-5
_K = 4  # conv kernel size used by the block


# ---------------------------------------------------------------------------
# Pallas kernels
# ---------------------------------------------------------------------------
def _down_kernel(p_ref, w_ref, b_ref, o_ref):
    """LeakyReLU(0.2) -> Conv2d(k=4,s=2,p=1) as one matmul.

    p_ref: (C_in*16, N*Ho*Wo) im2col patches of the raw, zero-padded input.
           LeakyReLU is applied element-wise in-kernel (LeakyReLU(0)==0, so the
           zero padding stays valid).
    w_ref: (C_out, C_in*16) reshaped conv weight.   b_ref: (C_out, 1) bias.
    o_ref: (C_out, N*Ho*Wo) conv output (channels-major, lane-dense).
    """
    p = p_ref[...]
    act = jnp.where(p >= 0, p, _LEAKY_SLOPE * p)
    out = jnp.dot(w_ref[...], act,
                  precision=jax.lax.Precision.HIGHEST,
                  preferred_element_type=jnp.float32) + b_ref[...]
    o_ref[...] = out.astype(o_ref.dtype)


def _up_kernel(p_ref, w_ref, b_ref, g_ref, beta_ref, mu_ref, var_ref,
               x_ref, o_ref):
    """ReLU -> ConvTranspose2d(k=4,s=2,p=1) -> BatchNorm (inference) -> concat.

    p_ref: (C_in*16, N*H*W) im2col patches of the zero-dilated / padded down
           feature map (ReLU applied in-kernel; ReLU(0)==0 keeps zeros valid).
    w_ref: (C_out, C_in*16) equivalent direct-conv weight of the transposed conv.
    b/g/beta/mu/var: (C_out, 1) per-channel bias + BatchNorm parameters.
    x_ref: (C_out, N*H*W) skip input (flattened channels-major).
    o_ref: (2*C_out, N*H*W): rows [0,C_out)=block output, rows [C_out,2C)=skip.
    """
    p = p_ref[...]
    act = jnp.maximum(p, 0.0)
    u = jnp.dot(w_ref[...], act,
                precision=jax.lax.Precision.HIGHEST,
                preferred_element_type=jnp.float32) + b_ref[...]
    inv_std = jax.lax.rsqrt(var_ref[...] + _BN_EPS)
    bn = (u - mu_ref[...]) * inv_std * g_ref[...] + beta_ref[...]
    c_out = w_ref.shape[0]
    o_ref[0:c_out, :] = bn.astype(o_ref.dtype)
    o_ref[c_out:, :] = x_ref[...].astype(o_ref.dtype)   # skip connection (concat)


# ---------------------------------------------------------------------------
# Wrapper helpers (pure layout plumbing, no compute hoisted out of the kernels)
# ---------------------------------------------------------------------------
def _im2col(xp, k, stride, oh, ow):
    """(N,C,Hp,Wp) zero-padded map -> (C*k*k, N*oh*ow) patch matrix.

    Row order (c,kh,kw) matches weight.reshape(C_out, C_in*k*k); column order
    is (n, oh, ow).
    """
    n, c, _, _ = xp.shape
    cols = []
    for kh in range(k):
        for kw in range(k):
            cols.append(xp[:, :,
                           kh:kh + stride * (oh - 1) + 1:stride,
                           kw:kw + stride * (ow - 1) + 1:stride])
    p = jnp.stack(cols, axis=0).reshape(k, k, n, c, oh, ow)
    p = p.transpose(3, 0, 1, 2, 4, 5)          # (c, kh, kw, n, oh, ow)
    return p.reshape(c * k * k, n * oh * ow)


def _vmem_call(kernel, num_inputs, out_shape):
    # Whole problem fits in one VMEM block: grid=() -> single invocation.
    return pl.pallas_call(
        kernel,
        out_shape=out_shape,
        in_specs=[pl.BlockSpec(memory_space=pltpu.MemorySpace.VMEM)] * num_inputs,
        out_specs=pl.BlockSpec(memory_space=pltpu.MemorySpace.VMEM),
    )


def unet_skip_block_forward(x, params):
    """Inference-mode forward of UnetSkipConnectionBlock(innermost=True)."""
    w_down, b_down, w_up, b_up, gamma, beta, r_mean, r_var = params
    n, c_in, h, w = x.shape                    # c_in == outer_nc
    inner_nc = w_down.shape[0]
    outer_nc = w_up.shape[1]                   # ConvTranspose2d weight is (in, out, k, k)
    assert c_in == outer_nc
    ho, wo = h // 2, w // 2
    f32 = jnp.float32

    # ---- down path: LeakyReLU -> Conv2d(k4, s2, p1) ----
    xp = jnp.pad(x, ((0, 0), (0, 0), (1, 1), (1, 1)))
    p_down = _im2col(xp, _K, 2, ho, wo)                         # (c_in*16, n*ho*wo)
    w_down_m = w_down.reshape(inner_nc, c_in * _K * _K)
    d_flat = _vmem_call(
        _down_kernel, 3,
        jax.ShapeDtypeStruct((inner_nc, n * ho * wo), f32))(
            p_down.astype(f32), w_down_m.astype(f32),
            b_down.reshape(inner_nc, 1).astype(f32))

    # ---- up path layout: ConvTranspose == zero-dilate + pad(k-1-p) + direct conv ----
    d_sp = d_flat.reshape(inner_nc, n, ho, wo).transpose(1, 0, 2, 3)
    d_dil = jnp.zeros((n, inner_nc, 2 * ho - 1, 2 * wo - 1), f32)
    d_dil = d_dil.at[:, :, ::2, ::2].set(d_sp)
    d_pad = jnp.pad(d_dil, ((0, 0), (0, 0), (2, 2), (2, 2)))
    p_up = _im2col(d_pad, _K, 1, h, w)                          # (inner*16, n*h*w)

    # equivalent direct-conv weight: swap in/out channels + flip spatially
    w_up_eq = jnp.transpose(w_up, (1, 0, 2, 3))[:, :, ::-1, ::-1]
    w_up_m = w_up_eq.reshape(outer_nc, inner_nc * _K * _K)

    x_flat = x.transpose(1, 0, 2, 3).reshape(c_in, n * h * w)
    col = lambda v: v.reshape(outer_nc, 1).astype(f32)

    y_flat = _vmem_call(
        _up_kernel, 8,
        jax.ShapeDtypeStruct((2 * outer_nc, n * h * w), f32))(
            p_up.astype(f32), w_up_m.astype(f32), col(b_up), col(gamma),
            col(beta), col(r_mean), col(r_var), x_flat.astype(f32))

    return y_flat.reshape(2 * outer_nc, n, h, w).transpose(1, 0, 2, 3)


# ---------------------------------------------------------------------------
# Pure-JAX reference (same PyTorch semantics) for correctness checking
# ---------------------------------------------------------------------------
def _reference_forward(x, params):
    w_down, b_down, w_up, b_up, gamma, beta, r_mean, r_var = params
    dn = ('NCHW', 'OIHW', 'NCHW')
    h1 = jnp.where(x >= 0, x, _LEAKY_SLOPE * x)
    d = jax.lax.conv_general_dilated(h1, w_down, (2, 2), ((1, 1), (1, 1)),
                                     dimension_numbers=dn,
                                     precision=jax.lax.Precision.HIGHEST)
    d = d + b_down[None, :, None, None]
    u1 = jnp.maximum(d, 0.0)
    w_eq = jnp.transpose(w_up, (1, 0, 2, 3))[:, :, ::-1, ::-1]
    u = jax.lax.conv_general_dilated(u1, w_eq, (1, 1), ((2, 2), (2, 2)),
                                     lhs_dilation=(2, 2), dimension_numbers=dn,
                                     precision=jax.lax.Precision.HIGHEST)
    u = u + b_up[None, :, None, None]
    bn = ((u - r_mean[None, :, None, None])
          * jax.lax.rsqrt(r_var[None, :, None, None] + _BN_EPS)
          * gamma[None, :, None, None] + beta[None, :, None, None])
    return jnp.concatenate([bn, x], axis=1)


if __name__ == "__main__":
    # UnetSkipConnectionBlock(outer_nc=4, dropout_value=0.25, inner_nc=4, innermost=True)
    N, outer_nc, inner_nc, H, W = 2, 4, 4, 16, 16
    dropout_value = 0.25  # TODO(synk): training-mode Dropout (stochastic) not modeled; eval mode = identity.

    key = jax.random.PRNGKey(0)
    ks = jax.random.split(key, 9)
    x = jax.random.normal(ks[0], (N, outer_nc, H, W), jnp.float32)
    w_down = 0.1 * jax.random.normal(ks[1], (inner_nc, outer_nc, _K, _K), jnp.float32)
    b_down = 0.1 * jax.random.normal(ks[2], (inner_nc,), jnp.float32)
    w_up = 0.1 * jax.random.normal(ks[3], (inner_nc, outer_nc, _K, _K), jnp.float32)
    b_up = 0.1 * jax.random.normal(ks[4], (outer_nc,), jnp.float32)
    gamma = 1.0 + 0.1 * jax.random.normal(ks[5], (outer_nc,), jnp.float32)
    beta = 0.1 * jax.random.normal(ks[6], (outer_nc,), jnp.float32)
    r_mean = 0.1 * jax.random.normal(ks[7], (outer_nc,), jnp.float32)
    r_var = jax.random.uniform(ks[8], (outer_nc,), jnp.float32, 0.5, 1.5)
    params = (w_down, b_down, w_up, b_up, gamma, beta, r_mean, r_var)

    y = jax.block_until_ready(unet_skip_block_forward(x, params))
    y_ref = jax.block_until_ready(_reference_forward(x, params))

    assert y.shape == (N, 2 * outer_nc, H, W) and y.dtype == jnp.float32
    max_err = float(jnp.max(jnp.abs(y - y_ref)))
    assert jnp.allclose(y, y_ref, rtol=1e-3, atol=1e-3), f"max_err={max_err}"

    print("KERNEL_OK")
</pallas_src>

<mosaic_0001>
module attributes {stable_mosaic.version = 11 : i64} {
  func.func @_down_kernel(%arg0: memref<64x128xf32, #tpu.memory_space<vmem>>, %arg1: memref<4x64xf32, #tpu.memory_space<vmem>>, %arg2: memref<4x1xf32, #tpu.memory_space<vmem>>, %arg3: memref<4x128xf32, #tpu.memory_space<vmem>>) attributes {dimension_semantics = [], scalar_prefetch = 0 : i64, scratch_operands = 0 : i64, tpu.core_type = #tpu.core_type<tc>} {
    %c0 = arith.constant 0 : index
    %c0_0 = arith.constant 0 : index
    %0 = vector.load %arg0[%c0, %c0_0] : memref<64x128xf32, #tpu.memory_space<vmem>>, vector<64x128xf32>
    %cst = arith.constant 0.000000e+00 : f32
    %1 = vector.broadcast %cst : f32 to vector<64x128xf32>
    %2 = arith.cmpf oge, %0, %1 : vector<64x128xf32>
    %cst_1 = arith.constant 2.000000e-01 : f32
    %3 = vector.broadcast %cst_1 : f32 to vector<64x128xf32>
    %4 = arith.mulf %3, %0 : vector<64x128xf32>
    %5 = arith.select %2, %0, %4 : vector<64x128xi1>, vector<64x128xf32>
    %c0_2 = arith.constant 0 : index
    %c0_3 = arith.constant 0 : index
    %6 = vector.load %arg1[%c0_2, %c0_3] : memref<4x64xf32, #tpu.memory_space<vmem>>, vector<4x64xf32>
    %cst_4 = arith.constant dense<0.000000e+00> : vector<4x128xf32>
    %7 = tpu.matmul %6, %5, %cst_4 {dimension_numbers = #tpu.dot_dimension_numbers<[1], [0], [0], [1], [0, 0, 1, 1], [], []>, precision = #tpu.contract_precision<fp32>} : vector<4x64xf32>, vector<64x128xf32>, vector<4x128xf32> -> vector<4x128xf32>
    %c0_5 = arith.constant 0 : index
    %c0_6 = arith.constant 0 : index
    %8 = vector.load %arg2[%c0_5, %c0_6] : memref<4x1xf32, #tpu.memory_space<vmem>>, vector<4x1xf32>
    %9 = vector.broadcast %8 : vector<4x1xf32> to vector<4x128xf32>
    %10 = arith.addf %7, %9 : vector<4x128xf32>
    %c0_7 = arith.constant 0 : index
    %c0_8 = arith.constant 0 : index
    %11 = vector.load %arg3[%c0_7, %c0_8] : memref<4x128xf32, #tpu.memory_space<vmem>>, vector<4x128xf32>
    tpu.vector_store %arg3[%c0_7, %c0_8], %10 {strides = array<i32>} : memref<4x128xf32, #tpu.memory_space<vmem>>, vector<4x128xf32>,
    return
  }
}

</mosaic_0001>

<llo_original>
// kernel: tpu_custom_call.1
$region0: #{tpu_custom_call.1}
  #allocation0 [shape = 'u32[]', space=smem, size = 0x4, offset = 0x4, fixed_abs, tag = 'smem constant byte address 0x4 - core index']
  #allocation1 [shape = 'u32[72,128]{1,0:T(1,128)}', space=vmem, size = 0x9000, scoped, tag = 'internal scratch']
  %s0 = inlined_call_operand.hbm [shape: f32[64,128], index: 0, kind: input, shape index: {}]
  %s1 = inlined_call_operand.vmem [shape: f32[4,64], index: 1, kind: input, shape index: {}]
  %s2 = inlined_call_operand.vmem [shape: f32[4,1], index: 2, kind: input, shape index: {}]
  %s3 = inlined_call_operand.hbm [shape: f32[4,128], index: 3, kind: output, shape index: {}]
  %s4 = sld [smem:[#allocation0]]
  $region26: #{tpu_custom_call.1} parent=0
    _
  %s6 = ssub.s32 1, %s4
  %s7 = scalar_select 0, %s6, %s4
  $region1: #{tpu_custom_call.1} parent=0
    #allocation2 [shape = 'u8[32768]{0}', space=vmem, size = 0x8000, scoped, tag = 'input window, operand 0, single buffered']
    #allocation3 [shape = 's32[1]{0}', space=sflag, size = 0x4, scoped, tag = 'scoped memory for tpu_custom_call.1']
    #allocation4 [shape = 's32[1]{0}', space=sflag, size = 0x4, scoped, tag = 'scoped memory for tpu_custom_call.1']
    #allocation5 [shape = 'u8[2048]{0}', space=vmem, size = 0x800, scoped, tag = 'output window, operand 0, single buffered']
    %8 = vsyncpa [#allocation3], 0
    %9 = vsyncpa [#allocation4], 0
    // Predicated region
    $region2: #{tpu_custom_call.1} parent=1 // pred_check
      _
    $region3: #{tpu_custom_call.1} parent=1 // pred_check_branch
      %11 = sbr.rel (0) target = $region5
    $region4: #{tpu_custom_call.1} parent=1 // pred_region
      %13 = vsyncadd [#allocation3], 0
      %s14 = sshll.u32 %s0, 4
      %s15 = int_to_ptr.hbm [resolvable:$true] %s14
      %s16 = sshll.u32 [#allocation2], 4
      %s17 = int_to_ptr.vmem [resolvable:$true] %s16
      %22 = dma.hbm_to_vmem [thread:$0]  %s15, 1024, %s17, [#allocation3], 128, 128, 8
    $region5: #{tpu_custom_call.1} parent=1 // pred_fallthru
      _
    // Predicated region
    $region6: #{tpu_custom_call.1} parent=1 // pred_check
      _
    $region7: #{tpu_custom_call.1} parent=1 // pred_check_branch
      %24 = sbr.rel (0) target = $region9
    $region8: #{tpu_custom_call.1} parent=1 // pred_region
      _
    $region9: #{tpu_custom_call.1} parent=1 // pred_fallthru
      _
    // Predicated region
    $region10: #{tpu_custom_call.1} parent=1 // pred_check
      _
    $region11: #{tpu_custom_call.1} parent=1 // pred_check_branch
      %26 = sbr.rel (0) target = $region13
    $region12: #{tpu_custom_call.1} parent=1 // pred_region
      _
    $region13: #{tpu_custom_call.1} parent=1 // pred_fallthru
      _
    // Predicated region
    $region14: #{tpu_custom_call.1} parent=1 // pred_check
      _
    $region15: #{tpu_custom_call.1} parent=1 // pred_check_branch
      %28 = sbr.rel (0) target = $region17
    $region16: #{tpu_custom_call.1} parent=1 // pred_region
      %30 = dma.done [#allocation3], 1024
    $region17: #{tpu_custom_call.1} parent=1 // pred_fallthru
      _
    %v31 = vld [vmem:[#allocation2] sm:$0xff]
    %v32 = vld [vmem:[#allocation2 + $0x8] sm:$0xff]
    %v33 = vld [vmem:[#allocation2 + $0x10] sm:$0xff]
    %v34 = vld [vmem:[#allocation2 + $0x18] sm:$0xff]
    %v35 = vld [vmem:[#allocation2 + $0x20] sm:$0xff]
    %v36 = vld [vmem:[#allocation2 + $0x28] sm:$0xff]
    %v37 = vld [vmem:[#allocation2 + $0x30] sm:$0xff]
    %v38 = vld [vmem:[#allocation2 + $0x38] sm:$0xff]
    %vm39 = vcmp.ge.f32.partialorder %v31, 0.0
    %vm40 = vcmp.ge.f32.partialorder %v32, 0.0
    %vm41 = vcmp.ge.f32.partialorder %v33, 0.0
    %vm42 = vcmp.ge.f32.partialorder %v34, 0.0
    %vm43 = vcmp.ge.f32.partialorder %v35, 0.0
    %vm44 = vcmp.ge.f32.partialorder %v36, 0.0
    %vm45 = vcmp.ge.f32.partialorder %v37, 0.0
    %vm46 = vcmp.ge.f32.partialorder %v38, 0.0
    %v47 = vmul.f32 %v31, 0.2
    %v48 = vmul.f32 %v32, 0.2
    %v49 = vmul.f32 %v33, 0.2
    %v50 = vmul.f32 %v34, 0.2
    %v51 = vmul.f32 %v35, 0.2
    %v52 = vmul.f32 %v36, 0.2
    %v53 = vmul.f32 %v37, 0.2
    %v54 = vmul.f32 %v38, 0.2
    %v55 = vsel %vm39, %v31, %v47
    %v56 = vsel %vm40, %v32, %v48
    %v57 = vsel %vm41, %v33, %v49
    %v58 = vsel %vm42, %v34, %v50
    %v59 = vsel %vm43, %v35, %v51
    %v60 = vsel %vm44, %v36, %v52
    %v61 = vsel %vm45, %v37, %v53
    %v62 = vsel %vm46, %v38, %v54
    %v63 = vld [vmem:[%s1] sm:$0xf]
    %v64 = vld [vmem:[%s2] sm:$0xf]
    %66 = vset.pattern.permute.xlu0 0
    %67 = vperm.xlu0 %66, %v64
    %v68 = vpop.permute.xlu0 %67
    %vm70 = vcmask 523264
    %v72 = vsel %vm70, %v63, 0
    %74 = vmatpush.msra.mxu0 0.0
    %75 = vmatpush.msra.mxu0 0.0
    %76 = vmatpush.msra.mxu0 0.0
    %77 = vmatpush.msra.mxu0 0.0
    %78 = vmatpush.msra.mxu0 0.0
    %79 = vmatpush.msra.mxu0 0.0
    %80 = vmatpush.msra.mxu0 0.0
    %81 = vmatpush.msra.mxu0 0.0
    %v82 = vand.u32 %v62, 4294901760
    %83 = vmatpush.msra.mxu0 %v82
    %v84 = vand.u32 %v61, 4294901760
    %85 = vmatpush.msra.mxu0 %v84
    %v86 = vand.u32 %v60, 4294901760
    %87 = vmatpush.msra.mxu0 %v86
    %v88 = vand.u32 %v59, 4294901760
    %89 = vmatpush.msra.mxu0 %v88
    %v90 = vand.u32 %v58, 4294901760
    %91 = vmatpush.msra.mxu0 %v90
    %v92 = vand.u32 %v57, 4294901760
    %93 = vmatpush.msra.mxu0 %v92
    %v94 = vand.u32 %v56, 4294901760
    %95 = vmatpush.msra.mxu0 %v94
    %v96 = vand.u32 %v55, 4294901760
    %97 = vmatpush.msra.mxu0 %v96
    %v98 = vand.u32 %v72, 4294901760
    %v99 = vsub.f32 %v72, %v98
    %v100 = vand.u32 %v99, 4294901760
    %v101 = vsub.f32 %v99, %v100
    %v102 = vand.u32 %v101, 4294901760
    %103 = vmatmul.f32.gmra.mxu0 %v102
    %v104 = vpop.f32.mrf.mxu0
    %v105 = vadd.f32 %v68, %v104
    %106 = vdwg.mxu0
    %107 = vmatpush.msra.mxu0 0.0
    %108 = vmatpush.msra.mxu0 0.0
    %109 = vmatpush.msra.mxu0 0.0
    %110 = vmatpush.msra.mxu0 0.0
    %111 = vmatpush.msra.mxu0 0.0
    %112 = vmatpush.msra.mxu0 0.0
    %113 = vmatpush.msra.mxu0 0.0
    %114 = vmatpush.msra.mxu0 0.0
    %v115 = vand.u32 %v62, 4294901760
    %v116 = vsub.f32 %v62, %v115
    %v117 = vand.u32 %v116, 4294901760
    %v118 = vsub.f32 %v116, %v117
    %v119 = vand.u32 %v118, 4294901760
    %120 = vmatpush.msra.mxu0 %v119
    %v121 = vand.u32 %v61, 4294901760
    %v122 = vsub.f32 %v61, %v121
    %v123 = vand.u32 %v122, 4294901760
    %v124 = vsub.f32 %v122, %v123
    %v125 = vand.u32 %v124, 4294901760
    %126 = vmatpush.msra.mxu0 %v125
    %v127 = vand.u32 %v60, 4294901760
    %v128 = vsub.f32 %v60, %v127
    %v129 = vand.u32 %v128, 4294901760
    %v130 = vsub.f32 %v128, %v129
    %v131 = vand.u32 %v130, 4294901760
    %132 = vmatpush.msra.mxu0 %v131
    %v133 = vand.u32 %v59, 4294901760
    %v134 = vsub.f32 %v59, %v133
    %v135 = vand.u32 %v134, 4294901760
    %v136 = vsub.f32 %v134, %v135
    %v137 = vand.u32 %v136, 4294901760
    %138 = vmatpush.msra.mxu0 %v137
    %v139 = vand.u32 %v58, 4294901760
    %v140 = vsub.f32 %v58, %v139
    %v141 = vand.u32 %v140, 4294901760
    %v142 = vsub.f32 %v140, %v141
    %v143 = vand.u32 %v142, 4294901760
    %144 = vmatpush.msra.mxu0 %v143
    %v145 = vand.u32 %v57, 4294901760
    %v146 = vsub.f32 %v57, %v145
    %v147 = vand.u32 %v146, 4294901760
    %v148 = vsub.f32 %v146, %v147
    %v149 = vand.u32 %v148, 4294901760
    %150 = vmatpush.msra.mxu0 %v149
    %v151 = vand.u32 %v56, 4294901760
    %v152 = vsub.f32 %v56, %v151
    %v153 = vand.u32 %v152, 4294901760
    %v154 = vsub.f32 %v152, %v153
    %v155 = vand.u32 %v154, 4294901760
    %156 = vmatpush.msra.mxu0 %v155
    %v157 = vand.u32 %v55, 4294901760
    %v158 = vsub.f32 %v55, %v157
    %v159 = vand.u32 %v158, 4294901760
    %v160 = vsub.f32 %v158, %v159
    %v161 = vand.u32 %v160, 4294901760
    %162 = vmatpush.msra.mxu0 %v161
    %v163 = vand.u32 %v72, 4294901760
    %164 = vmatmul.f32.gmra.mxu0 %v163
    %v165 = vpop.f32.mrf.mxu0
    %v166 = vadd.f32 %v105, %v165
    %167 = vdwg.mxu0
    %168 = vmatpush.msra.mxu0 0.0
    %169 = vmatpush.msra.mxu0 0.0
    %170 = vmatpush.msra.mxu0 0.0
    %171 = vmatpush.msra.mxu0 0.0
    %172 = vmatpush.msra.mxu0 0.0
    %173 = vmatpush.msra.mxu0 0.0
    %174 = vmatpush.msra.mxu0 0.0
    %175 = vmatpush.msra.mxu0 0.0
    %v176 = vand.u32 %v62, 4294901760
    %v177 = vsub.f32 %v62, %v176
    %178 = vmatpush.msra.mxu0 %v177
    %v179 = vand.u32 %v61, 4294901760
    %v180 = vsub.f32 %v61, %v179
    %181 = vmatpush.msra.mxu0 %v180
    %v182 = vand.u32 %v60, 4294901760
    %v183 = vsub.f32 %v60, %v182
    %184 = vmatpush.msra.mxu0 %v183
    %v185 = vand.u32 %v59, 4294901760
    %v186 = vsub.f32 %v59, %v185
    %187 = vmatpush.msra.mxu0 %v186
    %v188 = vand.u32 %v58, 4294901760
    %v189 = vsub.f32 %v58, %v188
    %190 = vmatpush.msra.mxu0 %v189
    %v191 = vand.u32 %v57, 4294901760
    %v192 = vsub.f32 %v57, %v191
    %193 = vmatpush.msra.mxu0 %v192
    %v194 = vand.u32 %v56, 4294901760
    %v195 = vsub.f32 %v56, %v194
    %196 = vmatpush.msra.mxu0 %v195
    %v197 = vand.u32 %v55, 4294901760
    %v198 = vsub.f32 %v55, %v197
    %199 = vmatpush.msra.mxu0 %v198
    %v200 = vand.u32 %v72, 4294901760
    %v201 = vsub.f32 %v72, %v200
    %202 = vmatmul.f32.gmra.mxu0 %v201
    %v203 = vpop.f32.mrf.mxu0
    %v204 = vadd.f32 %v166, %v203
    %205 = vdwg.mxu0
    %206 = vmatpush.msra.mxu0 0.0
    %207 = vmatpush.msra.mxu0 0.0
    %208 = vmatpush.msra.mxu0 0.0
    %209 = vmatpush.msra.mxu0 0.0
    %210 = vmatpush.msra.mxu0 0.0
    %211 = vmatpush.msra.mxu0 0.0
    %212 = vmatpush.msra.mxu0 0.0
    %213 = vmatpush.msra.mxu0 0.0
    %v214 = vand.u32 %v62, 4294901760
    %215 = vmatpush.msra.mxu0 %v214
    %v216 = vand.u32 %v61, 4294901760
    %217 = vmatpush.msra.mxu0 %v216
    %v218 = vand.u32 %v60, 4294901760
    %219 = vmatpush.msra.mxu0 %v218
    %v220 = vand.u32 %v59, 4294901760
    %221 = vmatpush.msra.mxu0 %v220
    %v222 = vand.u32 %v58, 4294901760
    %223 = vmatpush.msra.mxu0 %v222
    %v224 = vand.u32 %v57, 4294901760
    %225 = vmatpush.msra.mxu0 %v224
    %v226 = vand.u32 %v56, 4294901760
    %227 = vmatpush.msra.mxu0 %v226
    %v228 = vand.u32 %v55, 4294901760
    %229 = vmatpush.msra.mxu0 %v228
    %v230 = vand.u32 %v72, 4294901760
    %v231 = vsub.f32 %v72, %v230
    %v232 = vand.u32 %v231, 4294901760
    %233 = vmatmul.f32.gmra.mxu0 %v232
    %v234 = vpop.f32.mrf.mxu0
    %v235 = vadd.f32 %v204, %v234
    %236 = vdwg.mxu0
    %237 = vmatpush.msra.mxu0 0.0
    %238 = vmatpush.msra.mxu0 0.0
    %239 = vmatpush.msra.mxu0 0.0
    %240 = vmatpush.msra.mxu0 0.0
    %241 = vmatpush.msra.mxu0 0.0
    %242 = vmatpush.msra.mxu0 0.0
    %243 = vmatpush.msra.mxu0 0.0
    %244 = vmatpush.msra.mxu0 0.0
    %v245 = vand.u32 %v62, 4294901760
    %v246 = vsub.f32 %v62, %v245
    %v247 = vand.u32 %v246, 4294901760
    %248 = vmatpush.msra.mxu0 %v247
    %v249 = vand.u32 %v61, 4294901760
    %v250 = vsub.f32 %v61, %v249
    %v251 = vand.u32 %v250, 4294901760
    %252 = vmatpush.msra.mxu0 %v251
    %v253 = vand.u32 %v60, 4294901760
    %v254 = vsub.f32 %v60, %v253
    %v255 = vand.u32 %v254, 4294901760
    %256 = vmatpush.msra.mxu0 %v255
    %v257 = vand.u32 %v59, 4294901760
    %v258 = vsub.f32 %v59, %v257
    %v259 = vand.u32 %v258, 4294901760
    %260 = vmatpush.msra.mxu0 %v259
    %v261 = vand.u32 %v58, 4294901760
    %v262 = vsub.f32 %v58, %v261
    %v263 = vand.u32 %v262, 4294901760
    %264 = vmatpush.msra.mxu0 %v263
    %v265 = vand.u32 %v57, 4294901760
    %v266 = vsub.f32 %v57, %v265
    %v267 = vand.u32 %v266, 4294901760
    %268 = vmatpush.msra.mxu0 %v267
    %v269 = vand.u32 %v56, 4294901760
    %v270 = vsub.f32 %v56, %v269
    %v271 = vand.u32 %v270, 4294901760
    %272 = vmatpush.msra.mxu0 %v271
    %v273 = vand.u32 %v55, 4294901760
    %v274 = vsub.f32 %v55, %v273
    %v275 = vand.u32 %v274, 4294901760
    %276 = vmatpush.msra.mxu0 %v275
    %v277 = vand.u32 %v72, 4294901760
    %278 = vmatmul.f32.gmra.mxu0 %v277
    %v279 = vpop.f32.mrf.mxu0
    %v280 = vadd.f32 %v235, %v279
    %281 = vdwg.mxu0
    %282 = vmatpush.msra.mxu0 0.0
    %283 = vmatpush.msra.mxu0 0.0
    %284 = vmatpush.msra.mxu0 0.0
    %285 = vmatpush.msra.mxu0 0.0
    %286 = vmatpush.msra.mxu0 0.0
    %287 = vmatpush.msra.mxu0 0.0
    %288 = vmatpush.msra.mxu0 0.0
    %289 = vmatpush.msra.mxu0 0.0
    %v290 = vand.u32 %v62, 4294901760
    %291 = vmatpush.msra.mxu0 %v290
    %v292 = vand.u32 %v61, 4294901760
    %293 = vmatpush.msra.mxu0 %v292
    %v294 = vand.u32 %v60, 4294901760
    %295 = vmatpush.msra.mxu0 %v294
    %v296 = vand.u32 %v59, 4294901760
    %297 = vmatpush.msra.mxu0 %v296
    %v298 = vand.u32 %v58, 4294901760
    %299 = vmatpush.msra.mxu0 %v298
    %v300 = vand.u32 %v57, 4294901760
    %301 = vmatpush.msra.mxu0 %v300
    %v302 = vand.u32 %v56, 4294901760
    %303 = vmatpush.msra.mxu0 %v302
    %v304 = vand.u32 %v55, 4294901760
    %305 = vmatpush.msra.mxu0 %v304
    %v306 = vand.u32 %v72, 4294901760
    %307 = vmatmul.f32.gmra.mxu0 %v306
    %v308 = vpop.f32.mrf.mxu0
    %v309 = vadd.f32 %v280, %v308
    %310 = vdwg.mxu0
    %311 = vst [vmem:[#allocation5] sm:$0xf] %v309
    // Predicated region
    $region18: #{tpu_custom_call.1} parent=1 // pred_check
      _
    $region19: #{tpu_custom_call.1} parent=1 // pred_check_branch
      %313 = sbr.rel (0) target = $region21
    $region20: #{tpu_custom_call.1} parent=1 // pred_region
      %315 = vsyncadd [#allocation4], 0
      %s317 = sshll.u32 [#allocation5], 4
      %s318 = int_to_ptr.vmem [resolvable:$true] %s317
      %s319 = sshll.u32 %s3, 4
      %s320 = int_to_ptr.hbm [resolvable:$true] %s319
      %322 = dma.vmem_to_hbm [thread:$0]  %s318, 64, %s320, [#allocation4]
    $region21: #{tpu_custom_call.1} parent=1 // pred_fallthru
      _
    // Predicated region
    $region22: #{tpu_custom_call.1} parent=1 // pred_check
      _
    $region23: #{tpu_custom_call.1} parent=1 // pred_check_branch
      %324 = sbr.rel (0) target = $region25
    $region24: #{tpu_custom_call.1} parent=1 // pred_region
      %326 = dma.done [#allocation4], 64
    $region25: #{tpu_custom_call.1} parent=1 // pred_fallthru
      _
    %327 = vsyncpa [#allocation3], 1
    %328 = vsyncpa [#allocation4], 1

</llo_original>
